<compile_context>
chip_gen: v7x
topology: tpu7x:2x2x1
jax: 0.10.0
libtpu: 0.0.40
codegen_flags: <defaults>
</compile_context>

<pallas_src>
import functools

import numpy as np
import jax
import jax.numpy as jnp
from jax import lax
from jax.experimental import pallas as pl
from jax.experimental.pallas import tpu as pltpu


def _round_up(v, m):
    return ((v + m - 1) // m) * m


_ROLL_SIGN_CACHE = None


def _roll_sign():
    """Pin down pltpu.roll's rotation direction once, eagerly, on device.

    The conv kernel shifts partial products by +-1 rows; a flipped rotation
    convention would silently swap the kx=0 / kx=2 taps, so we probe it
    (sign=+1 means jnp.roll semantics: out[i] = in[i - shift])."""
    global _ROLL_SIGN_CACHE
    if _ROLL_SIGN_CACHE is None:
        def probe(x_ref, o_ref):
            o_ref[...] = pltpu.roll(x_ref[...], shift=1, axis=0)

        with jax.ensure_compile_time_eval():
            x = jnp.arange(8 * 128, dtype=jnp.float32).reshape(8, 128)
            y = pl.pallas_call(
                probe, out_shape=jax.ShapeDtypeStruct((8, 128), jnp.float32))(x)
            _ROLL_SIGN_CACHE = 1 if bool(jnp.all(y[1] == x[0])) else -1
    return _ROLL_SIGN_CACHE


def _down_block_kernel(x_ref, w1_ref, g1_ref, be1_ref, w2_ref, g2_ref, be2_ref,
                       mrow_ref, out_ref, pad1_ref, pad2_ref, *, roll_sign):
    """Whole DownBlock forward, resident in VMEM (gridless; fine at these sizes).

    x_ref   : (N, H, W, Cin)          input, NHWC, f32
    w?_ref  : (9, Cin_layer, Cout_p)  per-tap conv weights (ky*3+kx order), bf16,
                                      output channels zero-padded to 128 lanes
    g?/be?  : (1, Cout_p)             batchnorm gamma / beta (lane-padded)
    mrow_ref: (1, Mp)                 1.0 on true pixels, 0.0 on W pad columns
    out_ref : (N, Hh, Wp, Coutp)      lane-dense output slab (wrapper slices pad away)
    pad?_ref: (N, Hh+2, Wp, C)        zero-halo padded scratch, bf16; data occupies
                                      rows [1, Hh], cols [0, Wh) - everything aligned
    """
    N, H, W, Cin = x_ref.shape
    Hh, Wh = H // 2, W // 2
    Wp = pad1_ref.shape[2]
    Cmidp = pad2_ref.shape[-1]
    Coutp = out_ref.shape[-1]
    Mp = N * Hh * Wp              # rows fed to the MXU (incl. the Wp-Wh pad cols/row)
    m_true = float(N * Hh * Wh)   # true pixel count for the BN statistics
    eps = 1e-5

    # ---- MaxPool2d(2): sublane-strided loads for the even/odd W phases (canonical
    #      strided-load pattern), then a relayout-free untiled-H split for H ----
    we = x_ref[:, :, pl.ds(0, Wh, 2), :]                 # (N, H, Wh, Cin)
    wo = x_ref[:, :, pl.ds(1, Wh, 2), :]
    mw = jnp.maximum(we, wo).reshape(N, Hh, 2, Wh, Cin)  # split untiled H: free
    pooled = jnp.maximum(mw[:, :, 0], mw[:, :, 1])       # (N, Hh, Wh, Cin) f32

    # ---- pad1: zero halo rows + right pad cols, data at rows [1,Hh], cols [0,Wh) ----
    zrow1 = jnp.zeros((N, 1, Wp, Cin), jnp.bfloat16)
    pad1_ref[:, 0:1, :, :] = zrow1
    pad1_ref[:, Hh + 1:Hh + 2, :, :] = zrow1
    pad1_ref[:, 1:Hh + 1, Wh:Wp, :] = jnp.zeros((N, Hh, Wp - Wh, Cin), jnp.bfloat16)
    pad1_ref[:, 1:Hh + 1, 0:Wh, :] = pooled.astype(jnp.bfloat16)

    mrow = mrow_ref[...]   # (1, Mp) f32

    def conv3x3_bn_relu(pad_ref, w_ref, g_ref, be_ref):
        """3x3 conv (padding=1) as 9 accumulating bf16 MXU matmuls + fused BN/ReLU.

        ky: tile-aligned slice along H of the zero-halo buffer.
        kx: +-1 row rotation of the f32 partial product. Rows are (n, y, x)-ordered
            with >=1 zero pad column per row, so the values rotated across row /
            image boundaries are exactly the zeros the conv halo needs.
        BN: training-mode biased stats over the true N*Hh*Wh pixels, both moments
            reduced on the MXU via the pad-column mask row-vector; epilogue f32.
        """
        cin_l = pad_ref.shape[-1]
        cout_l = w_ref.shape[-1]
        padded = pad_ref[...]                              # (N, Hh+2, Wp, cin_l) bf16
        acc = jnp.zeros((Mp, cout_l), jnp.float32)
        for ky in range(3):
            slab = padded[:, ky:ky + Hh, :, :].reshape(Mp, cin_l)
            for kx in range(3):
                part = jnp.dot(slab, w_ref[ky * 3 + kx],
                               preferred_element_type=jnp.float32)
                if kx != 1:
                    part = pltpu.roll(part, shift=(roll_sign * (1 - kx)) % Mp, axis=0)
                acc = acc + part
        # batch statistics on the MXU (mask zeroes the pad-column rows' contribution)
        s1 = jnp.dot(mrow, acc, preferred_element_type=jnp.float32)         # (1, cout)
        s2 = jnp.dot(mrow, acc * acc, preferred_element_type=jnp.float32)   # (1, cout)
        mean = s1 * (1.0 / m_true)
        # single-pass variance; clamp guards f32 cancellation (mean ~ 0 for conv acts)
        var = jnp.maximum(s2 * (1.0 / m_true) - mean * mean, 0.0)
        scale = g_ref[...] * lax.rsqrt(var + eps)
        shift = be_ref[...] - mean * scale
        return jnp.maximum(acc * scale + shift, 0.0)                        # (Mp, cout)

    # ---- conv1 -> write straight into pad2's data rows (full-width aligned store) ----
    h1 = conv3x3_bn_relu(pad1_ref, w1_ref, g1_ref, be1_ref)                 # (Mp, Cmidp)
    zrow2 = jnp.zeros((N, 1, Wp, Cmidp), jnp.bfloat16)
    pad2_ref[:, 0:1, :, :] = zrow2
    pad2_ref[:, Hh + 1:Hh + 2, :, :] = zrow2
    pad2_ref[:, 1:Hh + 1, :, :] = h1.reshape(N, Hh, Wp, Cmidp).astype(jnp.bfloat16)
    # h1's pad columns hold ignored values; re-zero them (conv2's right halo)
    pad2_ref[:, 1:Hh + 1, Wh:Wp, :] = jnp.zeros((N, Hh, Wp - Wh, Cmidp), jnp.bfloat16)

    # ---- conv2 -> lane-dense output slab (wrapper slices the W / channel padding) ----
    h2 = conv3x3_bn_relu(pad2_ref, w2_ref, g2_ref, be2_ref)                 # (Mp, Coutp)
    out_ref[...] = h2.reshape(N, Hh, Wp, Coutp)


def down_block(x_nchw, w1, b1, g1, be1, w2, b2, g2, be2):
    """DownBlock forward. x_nchw: (N, Cin, H, W) -> (N, Cout, H//2, W//2).

    b1/b2 (conv biases) are accepted for API parity but not used in-kernel: they
    cancel exactly inside training-mode BatchNorm.
    """
    del b1, b2
    N, Cin, H, W = x_nchw.shape
    Hh, Wh = H // 2, W // 2
    Cmid, Cout = w1.shape[3], w2.shape[3]
    Cmidp = _round_up(Cmid, 128)    # lane-dense intermediate channels
    Coutp = _round_up(Cout, 128)    # lane-dense output channels
    Wp = _round_up(Wh + 1, 8)       # aligned padded width; >=1 zero col = W halo
    Mp = N * Hh * Wp

    # TODO(synk): drop both wrapper transposes when the surrounding layers can
    # produce/consume NHWC (or the lane-dense slab) directly; they are pure layout glue.
    x = jnp.transpose(x_nchw, (0, 2, 3, 1)).astype(jnp.float32)   # NCHW -> NHWC

    # per-tap weights (ky*3+kx, Cin_layer, Cout_p), zero-padded lane-dense, bf16.
    w1r = jnp.zeros((3, 3, Cin, Cmidp), jnp.float32).at[..., :Cmid].set(
        jnp.asarray(w1, jnp.float32))
    w1r = w1r.reshape(9, Cin, Cmidp).astype(jnp.bfloat16)
    w2r = jnp.zeros((3, 3, Cmidp, Coutp), jnp.float32).at[:, :, :Cmid, :Cout].set(
        jnp.asarray(w2, jnp.float32))
    w2r = w2r.reshape(9, Cmidp, Coutp).astype(jnp.bfloat16)
    g1r = jnp.ones((1, Cmidp), jnp.float32).at[:, :Cmid].set(
        jnp.asarray(g1, jnp.float32).reshape(1, Cmid))
    be1r = jnp.zeros((1, Cmidp), jnp.float32).at[:, :Cmid].set(
        jnp.asarray(be1, jnp.float32).reshape(1, Cmid))
    g2r = jnp.ones((1, Coutp), jnp.float32).at[:, :Cout].set(
        jnp.asarray(g2, jnp.float32).reshape(1, Cout))
    be2r = jnp.zeros((1, Coutp), jnp.float32).at[:, :Cout].set(
        jnp.asarray(be2, jnp.float32).reshape(1, Cout))
    # mask row-vector: 1.0 on true pixels, 0.0 on the Wp-Wh zero pad columns per row
    mrow = (jnp.arange(Mp) % Wp < Wh).astype(jnp.float32).reshape(1, Mp)

    kernel = functools.partial(_down_block_kernel, roll_sign=_roll_sign())

    # TODO(synk): for production-size inputs, re-architect as a BlockSpec-pipelined grid
    # over (N, Hh row-bands) with per-band sum / sum-of-squares scratch + a finalize
    # pass for BN, dimension_semantics=("parallel","arbitrary") (engages v7x's second
    # TensorCore), and per-generation vmem_limit_bytes (<= ~56 MiB on v7x, larger bands
    # on v5e/v6e). At these toy shapes everything fits comfortably in VMEM, so a single
    # gridless invocation is kept (32 MiB limit is safe on every generation).
    out4d = pl.pallas_call(
        kernel,
        out_shape=jax.ShapeDtypeStruct((N, Hh, Wp, Coutp), jnp.float32),
        in_specs=[pl.BlockSpec(memory_space=pltpu.MemorySpace.VMEM)] * 8,
        out_specs=pl.BlockSpec(memory_space=pltpu.MemorySpace.VMEM),
        scratch_shapes=[
            pltpu.VMEM((N, Hh + 2, Wp, Cin), jnp.bfloat16),    # zero-halo pooled input
            pltpu.VMEM((N, Hh + 2, Wp, Cmidp), jnp.bfloat16),  # zero-halo conv1 output
        ],
        compiler_params=pltpu.CompilerParams(vmem_limit_bytes=32 * 1024 * 1024),
    )(x, w1r, g1r, be1r, w2r, g2r, be2r, mrow)

    out = out4d[:, :, :Wh, :Cout]                 # drop W pad columns / channel pad
    return jnp.transpose(out, (0, 3, 1, 2))       # NHWC -> NCHW


def ref_down_block(x_nchw, w1, b1, g1, be1, w2, b2, g2, be2):
    """Pure-JAX (f32) reference matching PyTorch training-mode forward semantics,
    including the conv biases (which provably cancel inside BatchNorm)."""
    x = jnp.transpose(x_nchw, (0, 2, 3, 1))
    p = lax.reduce_window(x, -jnp.inf, lax.max, (1, 2, 2, 1), (1, 2, 2, 1), 'VALID')

    def block(h, w, b, g, be):
        y = lax.conv_general_dilated(h, w, (1, 1), 'SAME',
                                     dimension_numbers=('NHWC', 'HWIO', 'NHWC')) + b
        mean = jnp.mean(y, axis=(0, 1, 2))
        var = jnp.mean((y - mean) ** 2, axis=(0, 1, 2))
        y = (y - mean) * lax.rsqrt(var + 1e-5) * g + be
        return jnp.maximum(y, 0.0)

    y = block(p, w1, b1, g1, be1)
    y = block(y, w2, b2, g2, be2)
    return jnp.transpose(y, (0, 3, 1, 2))


if __name__ == "__main__":
    N, Cin, Cout, H, W = 2, 4, 8, 16, 16
    Cmid = Cout  # DoubleConv default: mid_channels = out_channels

    key = jax.random.PRNGKey(0)
    ks = jax.random.split(key, 9)
    x = jax.random.normal(ks[0], (N, Cin, H, W), jnp.float32)
    # conv weights in HWIO layout, deterministic synthetic init
    w1 = jax.random.normal(ks[1], (3, 3, Cin, Cmid), jnp.float32) / np.sqrt(9 * Cin)
    b1 = 0.1 * jax.random.normal(ks[2], (Cmid,), jnp.float32)
    g1 = 1.0 + 0.1 * jax.random.normal(ks[3], (Cmid,), jnp.float32)
    be1 = 0.1 * jax.random.normal(ks[4], (Cmid,), jnp.float32)
    w2 = jax.random.normal(ks[5], (3, 3, Cmid, Cout), jnp.float32) / np.sqrt(9 * Cmid)
    b2 = 0.1 * jax.random.normal(ks[6], (Cout,), jnp.float32)
    g2 = 1.0 + 0.1 * jax.random.normal(ks[7], (Cout,), jnp.float32)
    be2 = 0.1 * jax.random.normal(ks[8], (Cout,), jnp.float32)

    _roll_sign()   # resolve the rotation convention eagerly, before jit tracing

    fwd = jax.jit(down_block)
    out = jax.block_until_ready(fwd(x, w1, b1, g1, be1, w2, b2, g2, be2))

    ref = jax.block_until_ready(ref_down_block(x, w1, b1, g1, be1, w2, b2, g2, be2))
    # tolerance reflects bf16 MXU operands through two stacked conv+BN layers vs the
    # all-f32 reference; accumulation and all VPU/BN/ReLU math remain f32 in-kernel.
    np.testing.assert_allclose(np.asarray(out), np.asarray(ref), atol=5e-2, rtol=5e-2)
    assert out.shape == (N, Cout, H // 2, W // 2)
    print("KERNEL_OK")
</pallas_src>

<mosaic_0001>
module attributes {stable_mosaic.version = 11 : i64} {
  func.func @probe(%arg0: memref<8x128xf32, #tpu.memory_space<vmem>>, %arg1: memref<8x128xf32, #tpu.memory_space<vmem>>) attributes {dimension_semantics = [], scalar_prefetch = 0 : i64, scratch_operands = 0 : i64, tpu.core_type = #tpu.core_type<tc>} {
    %c0 = arith.constant 0 : index
    %c0_0 = arith.constant 0 : index
    %0 = vector.load %arg0[%c0, %c0_0] : memref<8x128xf32, #tpu.memory_space<vmem>>, vector<8x128xf32>
    %c1_i32 = arith.constant 1 : i32
    %1 = tpu.dynamic_rotate %0 by %c1_i32 dim 0 : vector<8x128xf32>, i32 -> vector<8x128xf32>
    %c0_1 = arith.constant 0 : index
    %c0_2 = arith.constant 0 : index
    %2 = vector.load %arg1[%c0_1, %c0_2] : memref<8x128xf32, #tpu.memory_space<vmem>>, vector<8x128xf32>
    tpu.vector_store %arg1[%c0_1, %c0_2], %1 {strides = array<i32>} : memref<8x128xf32, #tpu.memory_space<vmem>>, vector<8x128xf32>,
    return
  }
}

</mosaic_0001>

<llo_original>
// kernel: tpu_custom_call.1
$region0: #{tpu_custom_call.1}
  #allocation0 [shape = 'u32[]', space=smem, size = 0x4, offset = 0x4, fixed_abs, tag = 'smem constant byte address 0x4 - core index']
  #allocation1 [shape = 'u32[144,128]{1,0:T(1,128)}', space=vmem, size = 0x12000, scoped, tag = 'internal scratch']
  %s0 = inlined_call_operand.hbm [shape: f32[8,128], index: 0, kind: input, shape index: {}]
  %s1 = inlined_call_operand.hbm [shape: f32[8,128], index: 1, kind: output, shape index: {}]
  %s2 = sld [smem:[#allocation0]]
  $region18: #{tpu_custom_call.1} parent=0
    _
  %s4 = ssub.s32 1, %s2
  %s5 = scalar_select 0, %s4, %s2
  $region1: #{tpu_custom_call.1} parent=0
    #allocation2 [shape = 'u8[4096]{0}', space=vmem, size = 0x1000, scoped, tag = 'input window, operand 0, single buffered']
    #allocation3 [shape = 's32[1]{0}', space=sflag, size = 0x4, scoped, tag = 'scoped memory for tpu_custom_call.1']
    #allocation4 [shape = 's32[1]{0}', space=sflag, size = 0x4, scoped, tag = 'scoped memory for tpu_custom_call.1']
    #allocation5 [shape = 'u8[4096]{0}', space=vmem, size = 0x1000, scoped, tag = 'output window, operand 0, single buffered']
    %6 = vsyncpa [#allocation3], 0
    %7 = vsyncpa [#allocation4], 0
    // Predicated region
    $region2: #{tpu_custom_call.1} parent=1 // pred_check
      _
    $region3: #{tpu_custom_call.1} parent=1 // pred_check_branch
      %9 = sbr.rel (0) target = $region5
    $region4: #{tpu_custom_call.1} parent=1 // pred_region
      %s11 = ssub.s32 128, 128
      %12 = vsyncadd [#allocation3], %s11
      %s14 = sshll.u32 [#allocation2], 4
      %s15 = int_to_ptr.vmem [resolvable:$true] %s14
      %17 = dma.hbm_to_vmem [thread:$0]  %s0, 128, %s15, [#allocation3]
    $region5: #{tpu_custom_call.1} parent=1 // pred_fallthru
      _
    // Predicated region
    $region6: #{tpu_custom_call.1} parent=1 // pred_check
      _
    $region7: #{tpu_custom_call.1} parent=1 // pred_check_branch
      %19 = sbr.rel (0) target = $region9
    $region8: #{tpu_custom_call.1} parent=1 // pred_region
      %20 = dma.done [#allocation3], 128
    $region9: #{tpu_custom_call.1} parent=1 // pred_fallthru
      _
    %v21 = vld [vmem:[#allocation2] sm:$0xff]
    %v22 = vrot.slane %v21, 7
    %23 = vst [vmem:[#allocation5] sm:$0xff] %v22
    // Predicated region
    $region10: #{tpu_custom_call.1} parent=1 // pred_check
      _
    $region11: #{tpu_custom_call.1} parent=1 // pred_check_branch
      %25 = sbr.rel (0) target = $region13
    $region12: #{tpu_custom_call.1} parent=1 // pred_region
      %s27 = ssub.s32 128, 128
      %28 = vsyncadd [#allocation4], %s27
      %s30 = sshll.u32 [#allocation5], 4
      %s31 = int_to_ptr.vmem [resolvable:$true] %s30
      %33 = dma.vmem_to_hbm [thread:$0]  %s31, 128, %s1, [#allocation4]
    $region13: #{tpu_custom_call.1} parent=1 // pred_fallthru
      _
    // Predicated region
    $region14: #{tpu_custom_call.1} parent=1 // pred_check
      _
    $region15: #{tpu_custom_call.1} parent=1 // pred_check_branch
      %35 = sbr.rel (0) target = $region17
    $region16: #{tpu_custom_call.1} parent=1 // pred_region
      %36 = dma.done [#allocation4], 128
    $region17: #{tpu_custom_call.1} parent=1 // pred_fallthru
      _
    %37 = vsyncpa [#allocation3], 1
    %38 = vsyncpa [#allocation4], 1

</llo_original>
